<compile_context>
chip_gen: v7x
topology: tpu7x:2x2x1
jax: 0.10.0
libtpu: 0.0.40
codegen_flags: <defaults>
</compile_context>

<pallas_src>
import jax
import jax.numpy as jnp
from jax.experimental import pallas as pl
from jax.experimental.pallas import tpu as pltpu

D_MODEL = 32
DROPOUT_P = 0.1
EPS = 1e-6

_TILE_R = 512                                   # >= 512 rows per block when possible
_GOLDEN = 0x9E3779B9                            # seed spreading constant
_DROP_THRESH_I32 = int(DROPOUT_P * (1 << 31))   # compare in 31-bit (signed-safe) domain
_KEEP_SCALE = 1.0 / (1.0 - DROPOUT_P)


def _fmix32(x):
    """murmur3 finalizer on uint32 arrays (portable: plain jnp integer ops)."""
    x = x ^ (x >> 16)
    x = x * jnp.uint32(0x85EBCA6B)
    x = x ^ (x >> 13)
    x = x * jnp.uint32(0xC2B2AE35)
    x = x ^ (x >> 16)
    return x


def _dropout_keep_mask(global_idx_i32, seed_u32):
    """Boolean keep-mask with P(keep) = 1 - DROPOUT_P from a counter hash."""
    key = global_idx_i32.astype(jnp.uint32) + seed_u32 * jnp.uint32(_GOLDEN)
    bits = _fmix32(key)
    # top 31 bits -> non-negative int32, signed compare (safe on all lowerings)
    return (bits >> 1).astype(jnp.int32) >= jnp.int32(_DROP_THRESH_I32)


def _sublayer_connection_kernel(seed_ref,                 # scalar prefetch (SMEM)
                                x_ref, w_ref, bias_ref,   # inputs (VMEM tiles)
                                o_ref):                   # output tile
    x = x_ref[...].astype(jnp.float32)                    # (TILE_R, D)
    r, d = x.shape

    # ---- LayerNorm statistics (reference semantics: unbiased std, eps added to std)
    mean = jnp.mean(x, axis=-1, keepdims=True)
    xc = x - mean
    var_unbiased = jnp.sum(xc * xc, axis=-1, keepdims=True) * (1.0 / (d - 1))
    inv_std = 1.0 / (jnp.sqrt(var_unbiased) + EPS)         # divide only on (TILE_R, 1)
    xn = xc * inv_std                                      # one VPU mul per element
    # (a_2 / b_2 are folded into w_ref / bias_ref in the wrapper)

    # ---- sublayer: Linear(d_model, d_model) on the MXU
    y = jnp.dot(xn, w_ref[...], preferred_element_type=jnp.float32) + bias_ref[...]

    # ---- dropout (training semantics): integer-threshold mask + scale
    tile = pl.program_id(0)
    row = jax.lax.broadcasted_iota(jnp.int32, (r, d), 0)
    col = jax.lax.broadcasted_iota(jnp.int32, (r, d), 1)
    gidx = (tile * r + row) * d + col                      # unique per element & tile
    keep = _dropout_keep_mask(gidx, seed_ref[0].astype(jnp.uint32))
    y = jnp.where(keep, y * _KEEP_SCALE, 0.0)

    # ---- residual
    o_ref[...] = (x + y).astype(o_ref.dtype)


def sublayer_connection(x, a2, b2, w_t, bias, seed):
    """x: (B, S, D); a2, b2, bias: (D,); w_t: (D, D) = W.T (in, out); seed: (1,) int32."""
    B, S, D = x.shape
    R = B * S
    x2 = x.reshape(R, D)

    # Fold the LayerNorm affine into the Linear (one-time (D, D) op outside the kernel):
    #   (a2 * xn + b2) @ W^T + b  ==  xn @ (a2[:, None] * W^T) + (b2 @ W^T + b)
    w_fold = (a2[:, None] * w_t).astype(jnp.float32)
    b_fold = (b2 @ w_t + bias).astype(jnp.float32).reshape(1, D)

    tile_r = R if R < _TILE_R else _TILE_R
    grid = (pl.cdiv(R, tile_r),)

    out = pl.pallas_call(
        _sublayer_connection_kernel,
        out_shape=jax.ShapeDtypeStruct((R, D), x.dtype),
        grid_spec=pltpu.PrefetchScalarGridSpec(
            num_scalar_prefetch=1,
            grid=grid,
            in_specs=[
                pl.BlockSpec((tile_r, D), lambda i, s: (i, 0)),   # x row-tile
                pl.BlockSpec((D, D), lambda i, s: (0, 0)),        # folded W^T
                pl.BlockSpec((1, D), lambda i, s: (0, 0)),        # folded bias
            ],
            out_specs=pl.BlockSpec((tile_r, D), lambda i, s: (i, 0)),
        ),
        compiler_params=pltpu.CompilerParams(
            dimension_semantics=("parallel",)),                   # megacore on v7x
    )(seed, x2, w_fold, b_fold)
    return out.reshape(B, S, D)


def _reference(x, a2, b2, w_t, bias, seed):
    """Pure-JAX reference with the same hash-based dropout mask (for validation)."""
    B, S, D = x.shape
    R = B * S
    x2 = x.reshape(R, D).astype(jnp.float32)
    mean = jnp.mean(x2, axis=-1, keepdims=True)
    xc = x2 - mean
    var = jnp.sum(xc * xc, axis=-1, keepdims=True) / (D - 1)
    ln = a2 * (xc / (jnp.sqrt(var) + EPS)) + b2
    y = ln @ w_t + bias
    row = jnp.arange(R, dtype=jnp.int32)[:, None]
    col = jnp.arange(D, dtype=jnp.int32)[None, :]
    keep = _dropout_keep_mask(row * D + col, seed.astype(jnp.uint32)[0])
    y = jnp.where(keep, y * _KEEP_SCALE, 0.0)
    return (x2 + y).reshape(B, S, D).astype(x.dtype)


if __name__ == "__main__":
    key = jax.random.PRNGKey(0)
    kx, kw, kb = jax.random.split(key, 3)

    B, S, D = 2, 8, D_MODEL
    x = jax.random.normal(kx, (B, S, D), dtype=jnp.float32)

    # LayerNorm parameters (torch init: ones / zeros)
    a2 = jnp.ones((D,), dtype=jnp.float32)
    b2 = jnp.zeros((D,), dtype=jnp.float32)

    # Deterministic sublayer = Linear(D, D); torch stores weight as (out, in) and
    # computes x @ W.T + b, so we pass W.T = (in, out).
    w = jax.random.normal(kw, (D, D), dtype=jnp.float32) * 0.02
    bias = jax.random.normal(kb, (D,), dtype=jnp.float32) * 0.02
    w_t = w.T

    seed = jnp.array([0], dtype=jnp.int32)

    out = sublayer_connection(x, a2, b2, w_t, bias, seed)
    jax.block_until_ready(out)

    assert out.shape == (B, S, D) and out.dtype == x.dtype
    ref = _reference(x, a2, b2, w_t, bias, seed)
    assert bool(jnp.allclose(out, ref, rtol=1e-4, atol=1e-4)), "mismatch vs reference"
    print("KERNEL_OK")
</pallas_src>

<mosaic_0001>
module attributes {stable_mosaic.version = 11 : i64} {
  func.func @_sublayer_connection_kernel(%arg0: i32, %arg1: memref<1xi32, #tpu.memory_space<smem>>, %arg2: memref<16x32xf32, #tpu.memory_space<vmem>>, %arg3: memref<32x32xf32, #tpu.memory_space<vmem>>, %arg4: memref<1x32xf32, #tpu.memory_space<vmem>>, %arg5: memref<16x32xf32, #tpu.memory_space<vmem>>) attributes {dimension_semantics = [#tpu.dimension_semantics<parallel>], iteration_bounds = array<i64: 1>, scalar_prefetch = 1 : i64, scratch_operands = 0 : i64, tpu.core_type = #tpu.core_type<tc>, window_params = [{transform_indices = @transform_0, window_bounds = array<i64: 16, 32>}, {pipeline_mode = #tpu.pipeline_mode<synchronous>, transform_indices = @transform_1, window_bounds = array<i64: 32, 32>}, {pipeline_mode = #tpu.pipeline_mode<synchronous>, transform_indices = @transform_2, window_bounds = array<i64: 1, 32>}, {transform_indices = @transform_3, window_bounds = array<i64: 16, 32>}]} {
    %c0 = arith.constant 0 : index
    %c0_0 = arith.constant 0 : index
    %0 = vector.load %arg2[%c0, %c0_0] : memref<16x32xf32, #tpu.memory_space<vmem>>, vector<16x32xf32>
    %cst = arith.constant dense<0.000000e+00> : vector<16xf32>
    %1 = vector.multi_reduction <add>, %0, %cst [1] : vector<16x32xf32> to vector<16xf32>
    %2 = vector.shape_cast %1 : vector<16xf32> to vector<16x1xf32>
    %cst_1 = arith.constant 3.200000e+01 : f32
    %3 = vector.broadcast %cst_1 : f32 to vector<16x1xf32>
    %4 = arith.divf %2, %3 : vector<16x1xf32>
    %5 = vector.broadcast %4 : vector<16x1xf32> to vector<16x32xf32>
    %6 = arith.subf %0, %5 : vector<16x32xf32>
    %7 = arith.mulf %6, %6 : vector<16x32xf32>
    %cst_2 = arith.constant dense<0.000000e+00> : vector<16xf32>
    %8 = vector.multi_reduction <add>, %7, %cst_2 [1] : vector<16x32xf32> to vector<16xf32>
    %9 = vector.shape_cast %8 : vector<16xf32> to vector<16x1xf32>
    %cst_3 = arith.constant 0.0322580636 : f32
    %10 = vector.broadcast %cst_3 : f32 to vector<16x1xf32>
    %11 = arith.mulf %9, %10 : vector<16x1xf32>
    %12 = math.sqrt %11 : vector<16x1xf32>
    %cst_4 = arith.constant 9.99999997E-7 : f32
    %13 = vector.broadcast %cst_4 : f32 to vector<16x1xf32>
    %14 = arith.addf %12, %13 : vector<16x1xf32>
    %cst_5 = arith.constant 1.000000e+00 : f32
    %15 = vector.broadcast %cst_5 : f32 to vector<16x1xf32>
    %16 = arith.divf %15, %14 : vector<16x1xf32>
    %17 = vector.broadcast %16 : vector<16x1xf32> to vector<16x32xf32>
    %18 = arith.mulf %6, %17 : vector<16x32xf32>
    %c0_6 = arith.constant 0 : index
    %c0_7 = arith.constant 0 : index
    %19 = vector.load %arg3[%c0_6, %c0_7] : memref<32x32xf32, #tpu.memory_space<vmem>>, vector<32x32xf32>
    %cst_8 = arith.constant dense<0.000000e+00> : vector<16x32xf32>
    %20 = tpu.matmul %18, %19, %cst_8 {dimension_numbers = #tpu.dot_dimension_numbers<[1], [0], [0], [1], [0, 0, 1, 1], [], []>} : vector<16x32xf32>, vector<32x32xf32>, vector<16x32xf32> -> vector<16x32xf32>
    %c0_9 = arith.constant 0 : index
    %c0_10 = arith.constant 0 : index
    %21 = vector.load %arg4[%c0_9, %c0_10] : memref<1x32xf32, #tpu.memory_space<vmem>>, vector<1x32xf32>
    %22 = vector.broadcast %21 : vector<1x32xf32> to vector<16x32xf32>
    %23 = arith.addf %20, %22 : vector<16x32xf32>
    %24 = tpu.iota {dimensions = array<i32: 0>} : vector<16x32xi32>
    %25 = tpu.iota {dimensions = array<i32: 1>} : vector<16x32xi32>
    %c16_i32 = arith.constant 16 : i32
    %26 = arith.muli %arg0, %c16_i32 : i32
    %27 = vector.broadcast %26 : i32 to vector<16x32xi32>
    %28 = arith.addi %27, %24 : vector<16x32xi32>
    %c32_i32 = arith.constant 32 : i32
    %29 = vector.broadcast %c32_i32 : i32 to vector<16x32xi32>
    %30 = arith.muli %28, %29 : vector<16x32xi32>
    %31 = arith.addi %30, %25 : vector<16x32xi32>
    %c0_11 = arith.constant 0 : index
    %32 = memref.load %arg1[%c0_11] : memref<1xi32, #tpu.memory_space<smem>>
    %c-1640531527_i32 = arith.constant -1640531527 : i32
    %33 = arith.muli %32, %c-1640531527_i32 : i32
    %34 = vector.broadcast %33 : i32 to vector<16x32xi32>
    %35 = arith.addi %31, %34 : vector<16x32xi32>
    %c16_i32_12 = arith.constant 16 : i32
    %36 = vector.broadcast %c16_i32_12 : i32 to vector<16x32xi32>
    %37 = arith.shrui %35, %36 : vector<16x32xi32>
    %38 = arith.xori %35, %37 : vector<16x32xi32>
    %c-2048144789_i32 = arith.constant -2048144789 : i32
    %39 = vector.broadcast %c-2048144789_i32 : i32 to vector<16x32xi32>
    %40 = arith.muli %38, %39 : vector<16x32xi32>
    %c13_i32 = arith.constant 13 : i32
    %41 = vector.broadcast %c13_i32 : i32 to vector<16x32xi32>
    %42 = arith.shrui %40, %41 : vector<16x32xi32>
    %43 = arith.xori %40, %42 : vector<16x32xi32>
    %c-1028477387_i32 = arith.constant -1028477387 : i32
    %44 = vector.broadcast %c-1028477387_i32 : i32 to vector<16x32xi32>
    %45 = arith.muli %43, %44 : vector<16x32xi32>
    %c16_i32_13 = arith.constant 16 : i32
    %46 = vector.broadcast %c16_i32_13 : i32 to vector<16x32xi32>
    %47 = arith.shrui %45, %46 : vector<16x32xi32>
    %48 = arith.xori %45, %47 : vector<16x32xi32>
    %c1_i32 = arith.constant 1 : i32
    %49 = vector.broadcast %c1_i32 : i32 to vector<16x32xi32>
    %50 = arith.shrui %48, %49 : vector<16x32xi32>
    %c214748364_i32 = arith.constant 214748364 : i32
    %51 = vector.broadcast %c214748364_i32 : i32 to vector<16x32xi32>
    %52 = arith.cmpi sge, %50, %51 : vector<16x32xi32>
    %cst_14 = arith.constant 1.11111116 : f32
    %53 = vector.broadcast %cst_14 : f32 to vector<16x32xf32>
    %54 = arith.mulf %23, %53 : vector<16x32xf32>
    %cst_15 = arith.constant 0.000000e+00 : f32
    %55 = vector.broadcast %cst_15 : f32 to vector<16x32xf32>
    %56 = arith.select %52, %54, %55 : vector<16x32xi1>, vector<16x32xf32>
    %57 = arith.addf %0, %56 : vector<16x32xf32>
    %c0_16 = arith.constant 0 : index
    %c0_17 = arith.constant 0 : index
    %58 = vector.load %arg5[%c0_16, %c0_17] : memref<16x32xf32, #tpu.memory_space<vmem>>, vector<16x32xf32>
    tpu.vector_store %arg5[%c0_16, %c0_17], %57 {strides = array<i32>} : memref<16x32xf32, #tpu.memory_space<vmem>>, vector<16x32xf32>,
    return
  }
  func.func @transform_0(%arg0: i32, %arg1: memref<1xi32, #tpu.memory_space<smem>>) -> (i32, i32) {
    %c0_i32 = arith.constant 0 : i32
    %c0_i32_0 = arith.constant 0 : i32
    return %arg0, %c0_i32 : i32, i32
  }
  func.func @transform_1(%arg0: i32, %arg1: memref<1xi32, #tpu.memory_space<smem>>) -> (i32, i32) {
    %c0_i32 = arith.constant 0 : i32
    %c0_i32_0 = arith.constant 0 : i32
    %c0_i32_1 = arith.constant 0 : i32
    return %c0_i32, %c0_i32_0 : i32, i32
  }
  func.func @transform_2(%arg0: i32, %arg1: memref<1xi32, #tpu.memory_space<smem>>) -> (i32, i32) {
    %c0_i32 = arith.constant 0 : i32
    %c0_i32_0 = arith.constant 0 : i32
    %c0_i32_1 = arith.constant 0 : i32
    return %c0_i32, %c0_i32_0 : i32, i32
  }
  func.func @transform_3(%arg0: i32, %arg1: memref<1xi32, #tpu.memory_space<smem>>) -> (i32, i32) {
    %c0_i32 = arith.constant 0 : i32
    %c0_i32_0 = arith.constant 0 : i32
    return %arg0, %c0_i32 : i32, i32
  }
}

</mosaic_0001>

<llo_original>
// kernel: tpu_custom_call.1
$region0: #{tpu_custom_call.1}
  #allocation0 [shape = 'u32[]', space=smem, size = 0x4, offset = 0x4, fixed_abs, tag = 'smem constant byte address 0x4 - core index']
  #allocation1 [shape = 'u32[144,128]{1,0:T(1,128)}', space=vmem, size = 0x12000, scoped, tag = 'internal scratch']
  #allocation2 [shape = 's32[1]{0}', space=sflag, size = 0x4, scoped, tag = 'scoped memory for tpu_custom_call.1']
  #allocation3 [shape = 's32[1]{0:T(128)S(6)}', space=smem, size = 0x200, scoped, tag = 'prefetched SMEM operand 0']
  %s0 = inlined_call_operand.<no memory space> [shape: s32[1], index: 0, kind: input, shape index: {}]
  %s1 = inlined_call_operand.hbm [shape: f32[16,32], index: 1, kind: input, shape index: {}]
  %s2 = inlined_call_operand.hbm [shape: f32[32,32], index: 2, kind: input, shape index: {}]
  %s3 = inlined_call_operand.vmem [shape: f32[1,32], index: 3, kind: input, shape index: {}]
  %s4 = inlined_call_operand.hbm [shape: f32[16,32], index: 4, kind: output, shape index: {}]
  %s5 = sld [smem:[#allocation0]]
  $region30: #{tpu_custom_call.1} parent=0
    _
  %s7 = ssub.s32 1, %s5
  %s8 = scalar_select 0, %s7, %s5
  %9 = sst [smem:[#allocation3]] %s0
  $region1: #{tpu_custom_call.1} parent=0
    #allocation4 [shape = 'u8[8192]{0}', space=vmem, size = 0x2000, scoped, tag = 'input window, operand 1, single buffered']
    #allocation5 [shape = 's32[1]{0}', space=sflag, size = 0x4, scoped, tag = 'scoped memory for tpu_custom_call.1']
    #allocation6 [shape = 's32[1]{0}', space=sflag, size = 0x4, scoped, tag = 'scoped memory for tpu_custom_call.1']
    #allocation7 [shape = 'u8[16384]{0}', space=vmem, size = 0x4000, scoped, tag = 'input window, operand 2, single buffered']
    #allocation8 [shape = 's32[1]{0}', space=sflag, size = 0x4, scoped, tag = 'scoped memory for tpu_custom_call.1']
    #allocation9 [shape = 'u8[8192]{0}', space=vmem, size = 0x2000, scoped, tag = 'output window, operand 0, single buffered']
    %10 = vsyncpa [#allocation5], 0
    %11 = vsyncpa [#allocation8], 0
    %12 = vsyncpa [#allocation6], 0
    // Predicated region
    $region2: #{tpu_custom_call.1} parent=1 // pred_check
      _
    $region3: #{tpu_custom_call.1} parent=1 // pred_check_branch
      %14 = sbr.rel (0) target = $region5
    $region4: #{tpu_custom_call.1} parent=1 // pred_region
      %s16 = ssub.s32 256, 256
      %17 = vsyncadd [#allocation5], %s16
      %s18 = sshll.u32 [#allocation4], 4
      %s19 = int_to_ptr.vmem [resolvable:$true] %s18
      %24 = dma.hbm_to_vmem [thread:$0]  %s1, 256, %s19, [#allocation5], 128, 128, 8
    $region5: #{tpu_custom_call.1} parent=1 // pred_fallthru
      _
    // Predicated region
    $region6: #{tpu_custom_call.1} parent=1 // pred_check
      _
    $region7: #{tpu_custom_call.1} parent=1 // pred_check_branch
      %26 = sbr.rel (0) target = $region9
    $region8: #{tpu_custom_call.1} parent=1 // pred_region
      %s28 = ssub.s32 512, 512
      %29 = vsyncadd [#allocation8], %s28
      %s30 = sshll.u32 [#allocation7], 4
      %s31 = int_to_ptr.vmem [resolvable:$true] %s30
      %36 = dma.hbm_to_vmem [thread:$0]  %s2, 512, %s31, [#allocation8], 128, 128, 8
    $region9: #{tpu_custom_call.1} parent=1 // pred_fallthru
      _
    // Predicated region
    $region10: #{tpu_custom_call.1} parent=1 // pred_check
      _
    $region11: #{tpu_custom_call.1} parent=1 // pred_check_branch
      %38 = sbr.rel (0) target = $region13
    $region12: #{tpu_custom_call.1} parent=1 // pred_region
      _
    $region13: #{tpu_custom_call.1} parent=1 // pred_fallthru
      _
    // Predicated region
    $region14: #{tpu_custom_call.1} parent=1 // pred_check
      _
    $region15: #{tpu_custom_call.1} parent=1 // pred_check_branch
      %40 = sbr.rel (0) target = $region17
    $region16: #{tpu_custom_call.1} parent=1 // pred_region
      %41 = dma.done [#allocation5], 256
    $region17: #{tpu_custom_call.1} parent=1 // pred_fallthru
      _
    // Predicated region
    $region18: #{tpu_custom_call.1} parent=1 // pred_check
      _
    $region19: #{tpu_custom_call.1} parent=1 // pred_check_branch
      %43 = sbr.rel (0) target = $region21
    $region20: #{tpu_custom_call.1} parent=1 // pred_region
      %44 = dma.done [#allocation8], 512
    $region21: #{tpu_custom_call.1} parent=1 // pred_fallthru
      _
    %v45 = vld [vmem:[#allocation4] sm:$0xff]
    %v46 = vld [vmem:[#allocation4 + $0x8] sm:$0xff]
    %vm47 = vcmask 261120
    %v48 = vsel %vm47, %v45, 0.0
    %49 = vadd.xlane.f32.xlu0 %v48
    %v50 = vpop.xlane.xlu0 %49
    %v51 = vsel %vm47, %v46, 0.0
    %52 = vadd.xlane.f32.xlu0 %v51
    %v53 = vpop.xlane.xlu0 %52
    %v54 = vrcp.pop 32.0
    %v55 = vmul.f32 %v50, %v54
    %v56 = vmul.f32 %v53, %v54
    %v57 = vsub.f32 %v45, %v55
    %v58 = vsub.f32 %v46, %v56
    %v59 = vmul.f32 %v57, %v57
    %v60 = vmul.f32 %v58, %v58
    %v61 = vsel %vm47, %v59, 0.0
    %62 = vadd.xlane.f32.xlu0 %v61
    %v63 = vpop.xlane.xlu0 %62
    %v64 = vsel %vm47, %v60, 0.0
    %65 = vadd.xlane.f32.xlu0 %v64
    %v66 = vpop.xlane.xlu0 %65
    %v67 = vmul.f32 %v63, 0.032258064
    %v68 = vmul.f32 %v66, 0.032258064
    %v69 = vrsqrt.pop %v67
    %v70 = vmul.f32 %v67, %v69
    %vm71 = vcmp.eq.f32.partialorder %v67, inf
    %v72 = vsel %vm71, %v67, %v70
    %vm73 = vcmp.eq.f32.partialorder %v67, 0.0
    %v74 = vand.u32 %v67, 2147483648
    %v75 = vsel %vm73, %v74, %v72
    %v76 = vrsqrt.pop %v68
    %v77 = vmul.f32 %v68, %v76
    %vm78 = vcmp.eq.f32.partialorder %v68, inf
    %v79 = vsel %vm78, %v68, %v77
    %vm80 = vcmp.eq.f32.partialorder %v68, 0.0
    %v81 = vand.u32 %v68, 2147483648
    %v82 = vsel %vm80, %v81, %v79
    %v83 = vadd.f32 %v75, 1e-06
    %v84 = vadd.f32 %v82, 1e-06
    %v85 = vrcp.pop %v83
    %v86 = vmul.f32 1.0, %v85
    %v87 = vrcp.pop %v84
    %v88 = vmul.f32 1.0, %v87
    %v89 = vmul.f32 %v57, %v86
    %v90 = vmul.f32 %v58, %v88
    %v91 = vld [vmem:[#allocation7] sm:$0xff]
    %v92 = vld [vmem:[#allocation7 + $0x8] sm:$0xff]
    %v93 = vld [vmem:[#allocation7 + $0x10] sm:$0xff]
    %v94 = vld [vmem:[#allocation7 + $0x18] sm:$0xff]
    %v95 = vld [vmem:[%s3] sm:$0x1]
    %v97 = vlaneseq
    %v98 = vshrl.u32 %v97, 7
    %v99 = vsub.s32 0, %v98
    %v100 = vrot.slane %v95, %v99
    %v103 = vsel %vm47, %v89, 0
    %v106 = vsel %vm47, %v90, 0
    %108 = vmatprep.subr.mxu0 0.0
    %109 = vmatpush1.msra.mxu0 %v91
    %110 = vmatprep.subr.mxu0 0.0
    %111 = vmatpush1.msra.mxu0 %v92
    %112 = vmatprep.subr.mxu0 0.0
    %113 = vmatpush1.msra.mxu0 %v93
    %114 = vmatprep.subr.mxu0 0.0
    %115 = vmatpush1.msra.mxu0 %v94
    %116 = vmatprep.subr.mxu0 0.0
    %117 = vmatpush1.msra.mxu0 0.0
    %118 = vmatprep.subr.mxu0 0.0
    %119 = vmatpush1.msra.mxu0 0.0
    %120 = vmatprep.subr.mxu0 0.0
    %121 = vmatpush1.msra.mxu0 0.0
    %122 = vmatprep.subr.mxu0 0.0
    %123 = vmatpush1.msra.mxu0 0.0
    %124 = vmatprep.subr.mxu0 0.0
    %125 = vmatpush1.msra.mxu0 0.0
    %126 = vmatprep.subr.mxu0 0.0
    %127 = vmatpush1.msra.mxu0 0.0
    %128 = vmatprep.subr.mxu0 0.0
    %129 = vmatpush1.msra.mxu0 0.0
    %130 = vmatprep.subr.mxu0 0.0
    %131 = vmatpush1.msra.mxu0 0.0
    %132 = vmatprep.subr.mxu0 0.0
    %133 = vmatpush1.msra.mxu0 0.0
    %134 = vmatprep.subr.mxu0 0.0
    %135 = vmatpush1.msra.mxu0 0.0
    %136 = vmatprep.subr.mxu0 0.0
    %137 = vmatpush1.msra.mxu0 0.0
    %138 = vmatprep.subr.mxu0 0.0
    %139 = vmatpush1.msra.mxu0 0.0
    %140 = vmatprep.subr.mxu0 0.0
    %141 = vmatpush1.msra.mxu0 0.0
    %142 = vmatprep.subr.mxu0 0.0
    %143 = vmatpush1.msra.mxu0 0.0
    %144 = vmatprep.subr.mxu0 0.0
    %145 = vmatpush1.msra.mxu0 0.0
    %146 = vmatprep.subr.mxu0 0.0
    %147 = vmatpush1.msra.mxu0 0.0
    %148 = vmatprep.subr.mxu0 0.0
    %149 = vmatpush1.msra.mxu0 0.0
    %150 = vmatprep.subr.mxu0 0.0
    %151 = vmatpush1.msra.mxu0 0.0
    %152 = vmatprep.subr.mxu0 0.0
    %153 = vmatpush1.msra.mxu0 0.0
    %154 = vmatprep.subr.mxu0 0.0
    %155 = vmatpush1.msra.mxu0 0.0
    %156 = vmatprep.subr.mxu0 0.0
    %157 = vmatpush1.msra.mxu0 0.0
    %158 = vmatprep.subr.mxu0 0.0
    %159 = vmatpush1.msra.mxu0 0.0
    %160 = vmatprep.subr.mxu0 0.0
    %161 = vmatpush1.msra.mxu0 0.0
    %162 = vmatprep.subr.mxu0 0.0
    %163 = vmatpush1.msra.mxu0 0.0
    %164 = vmatprep.subr.mxu0 0.0
    %165 = vmatpush1.msra.mxu0 0.0
    %166 = vmatprep.subr.mxu0 0.0
    %167 = vmatpush1.msra.mxu0 0.0
    %168 = vmatprep.subr.mxu0 0.0
    %169 = vmatpush1.msra.mxu0 0.0
    %170 = vmatprep.subr.mxu0 0.0
    %171 = vmatpush1.msra.mxu0 0.0
    %172 = vmatprep.mubr.f32.mxu0 0.0
    %173 = vmatmul.mubr.f32.gmra.mrb[0].mxu0 %v103
    %v174 = vpop.f32.mrb[0].mxu0
    %v175 = vadd.f32 %v100, %v174
    %v176 = vpop.f32.mrb[0].mxu0
    %177 = vmatprep.mubr.f32.mxu0 0.0
    %178 = vmatmul.mubr.f32.gmra.mrb[0].mxu0 %v106
    %v179 = vpop.f32.mrb[0].mxu0
    %v180 = vadd.f32 %v100, %v179
    %v181 = vpop.f32.mrb[0].mxu0
    %182 = vdwg.mxu0
    %v183 = vlaneseq
    %v184 = vshrl.u32 %v183, 7
    %v185 = vadd.s32 %v184, 8
    %v186 = vlaneseq
    %v187 = vand.u32 %v186, 127
    %s188 = smul.u32 0, 16
    %v189 = vstv %s188
    %v190 = vadd.s32 %v189, %v184
    %v191 = vadd.s32 %v189, %v185
    %v192 = vmul.u32 %v190, 32
    %v193 = vmul.u32 %v191, 32
    %v194 = vadd.s32 %v192, %v187
    %v195 = vadd.s32 %v193, %v187
    %s196 = sld [smem:[#allocation3]]
    %s197 = smul.u32 %s196, 2654435769
    %v198 = vstv %s197
    %v199 = vadd.s32 %v194, %v198
    %v200 = vadd.s32 %v195, %v198
    %v201 = vshrl.u32 %v199, 16
    %v202 = vshrl.u32 %v200, 16
    %v203 = vxor.u32 %v199, %v201
    %v204 = vxor.u32 %v200, %v202
    %v205 = vmul.u32 %v203, 2246822507
    %v206 = vmul.u32 %v204, 2246822507
    %v207 = vshrl.u32 %v205, 13
    %v208 = vshrl.u32 %v206, 13
    %v209 = vxor.u32 %v205, %v207
    %v210 = vxor.u32 %v206, %v208
    %v211 = vmul.u32 %v209, 3266489909
    %v212 = vmul.u32 %v210, 3266489909
    %v213 = vshrl.u32 %v211, 16
    %v214 = vshrl.u32 %v212, 16
    %v215 = vxor.u32 %v211, %v213
    %v216 = vxor.u32 %v212, %v214
    %v217 = vshrl.u32 %v215, 1
    %v218 = vshrl.u32 %v216, 1
    %vm219 = vcmp.ge.s32.totalorder %v217, 214748364
    %vm220 = vcmp.ge.s32.totalorder %v218, 214748364
    %v221 = vmul.f32 %v175, 1.1111112
    %v222 = vmul.f32 %v180, 1.1111112
    %v223 = vsel %vm219, %v221, 0.0
    %v224 = vsel %vm220, %v222, 0.0
    %v225 = vadd.f32 %v45, %v223
    %v226 = vadd.f32 %v46, %v224
    %227 = vst.msk [vmem:[#allocation9] sm:$0xff] %vm47, %v225
    %228 = vst.msk [vmem:[#allocation9 + $0x8] sm:$0xff] %vm47, %v226
    // Predicated region
    $region22: #{tpu_custom_call.1} parent=1 // pred_check
      _
    $region23: #{tpu_custom_call.1} parent=1 // pred_check_branch
      %230 = sbr.rel (0) target = $region25
    $region24: #{tpu_custom_call.1} parent=1 // pred_region
      %s232 = ssub.s32 256, 256
      %233 = vsyncadd [#allocation6], %s232
      %s234 = sshll.u32 [#allocation9], 4
      %s235 = int_to_ptr.vmem [resolvable:$true] %s234
      %240 = dma.vmem_to_hbm [thread:$0]  %s235, 256, %s4, [#allocation6], 128, 128, 8
    $region25: #{tpu_custom_call.1} parent=1 // pred_fallthru
      _
    // Predicated region
    $region26: #{tpu_custom_call.1} parent=1 // pred_check
      _
    $region27: #{tpu_custom_call.1} parent=1 // pred_check_branch
      %242 = sbr.rel (0) target = $region29
    $region28: #{tpu_custom_call.1} parent=1 // pred_region
      %243 = dma.done [#allocation6], 256
    $region29: #{tpu_custom_call.1} parent=1 // pred_fallthru
      _
    %244 = vsyncpa [#allocation5], 1
    %245 = vsyncpa [#allocation8], 1
    %246 = vsyncpa [#allocation6], 1

</llo_original>
